<compile_context>
chip_gen: v7x
topology: tpu7x:2x2x1
jax: 0.10.0
libtpu: 0.0.40
codegen_flags: <defaults>
</compile_context>

<pallas_src>
import functools

import jax
import jax.numpy as jnp
from jax import lax
from jax.experimental import pallas as pl
from jax.experimental.pallas import tpu as pltpu

_ALPHA = -1.7580993408473766
_LANE = 128
# 4096 rows x 128 lanes x 4 B = 2 MiB per f32 block (~90% of HBM roofline at
# ~0.35 us per-grid-step overhead).
_DEFAULT_BLOCK_ROWS = 4096
# Above this many rows, force >= 2 grid blocks so v7x's two TensorCores both
# get work (no-op on single-TC v5e/v6e).
_MIN_ROWS_FOR_MULTIBLOCK = 1024
_VMEM_LIMIT_BYTES = 32 * 1024 * 1024
_GOLDEN = 0x9E3779B9


def _round_up(x, m):
    return -(-x // m) * m


def _hash32(v):
    """lowbias32 (Chris Wellons): one xorshift-multiply round, 2 u32 mults."""
    v = v ^ (v >> jnp.uint32(16))
    v = v * jnp.uint32(0x7FEB352D)
    v = v ^ (v >> jnp.uint32(15))
    v = v * jnp.uint32(0x846CA68B)
    v = v ^ (v >> jnp.uint32(16))
    return v


def _alpha_dropout_kernel(seed_ref, x_ref, o_ref, *, p, split16, compute_dtype):
    """Applies alpha dropout to one (block_rows, 128) tile."""
    blk_rows, lanes = x_ref.shape
    cdt = jnp.dtype(compute_dtype)

    # ---- alpha-dropout affine constants (static Python math) ---------------
    keep_prob = 1.0 - p
    a = (keep_prob + _ALPHA * _ALPHA * keep_prob * (1.0 - keep_prob)) ** (-0.5)
    b = -a * _ALPHA * (1.0 - keep_prob)
    alpha_c = jnp.asarray(_ALPHA, cdt)
    a_c = jnp.asarray(a, cdt)
    b_c = jnp.asarray(b, cdt)

    def affine(x_block, drop):
        xv = x_block.astype(cdt)
        y = jnp.where(drop, alpha_c, xv)
        return (y * a_c + b_c).astype(o_ref.dtype)

    if split16:
        # One 32-bit hash per TWO elements: lo 16 bits -> top half of the
        # block, hi 16 bits -> bottom half.  blk_rows % 16 == 0 is guaranteed
        # by the wrapper, so each half is a whole number of sublanes.
        half = blk_rows // 2
        # Scalar-unit base: per-block counter offset + pre-folded seed.
        base = pl.program_id(0) * jnp.int32(half * lanes) + seed_ref[0]
        row = lax.broadcasted_iota(jnp.int32, (half, lanes), 0)
        col = lax.broadcasted_iota(jnp.int32, (half, lanes), 1)
        u = (row * jnp.int32(lanes) + col + base).astype(jnp.uint32)
        u = _hash32(u)
        thresh16 = jnp.uint32(int(round(p * 65536.0)))
        drop_lo = (u & jnp.uint32(0xFFFF)) < thresh16
        drop_hi = (u >> jnp.uint32(16)) < thresh16
        o_ref[pl.ds(0, half), :] = affine(x_ref[pl.ds(0, half), :], drop_lo)
        o_ref[pl.ds(half, half), :] = affine(x_ref[pl.ds(half, half), :], drop_hi)
    else:
        # Fallback: one hash per element, full 32-bit threshold.
        base = pl.program_id(0) * jnp.int32(blk_rows * lanes) + seed_ref[0]
        row = lax.broadcasted_iota(jnp.int32, (blk_rows, lanes), 0)
        col = lax.broadcasted_iota(jnp.int32, (blk_rows, lanes), 1)
        u = (row * jnp.int32(lanes) + col + base).astype(jnp.uint32)
        u = _hash32(u)
        thresh32 = jnp.uint32(min(int(round(p * (2.0 ** 32))), 0xFFFFFFFF))
        drop = u < thresh32
        o_ref[...] = affine(x_ref[...], drop)


def _on_v5e():
    """v5e's VPU has no native bf16 ALU -> compute the affine in f32 there."""
    try:
        kind = jax.devices()[0].device_kind.lower()
    except Exception:
        return False
    return ("v5 lite" in kind) or ("v5e" in kind) or ("v5litepod" in kind)


def alpha_dropout(x, *, p=0.5, training=False, seed=0):
    """Alpha dropout forward pass. Identity when not training or p == 0."""
    if p < 0 or p > 1:
        raise ValueError(
            "dropout probability has to be between 0 and 1, but got {}".format(p))
    if p == 0 or not training:
        return x
    if p == 1:
        # keep_prob == 0 makes a = keep_prob**-0.5 infinite; PyTorch returns
        # all-NaN (alpha*inf + inf).  Mirror that instead of tripping Python's
        # 0.0 ** -0.5 ZeroDivisionError.
        return jnp.full(x.shape, jnp.nan, dtype=x.dtype)

    orig_shape = x.shape
    orig_dtype = x.dtype
    n = x.size
    if n == 0:
        return x

    # Flatten to a lane-dense [rows, 128] slab.  Pad ONLY when the element
    # count is not lane-aligned (pad + final slice each add an HBM pass).
    rows = pl.cdiv(n, _LANE)
    x_flat = jnp.ravel(x)
    pad = rows * _LANE - n
    if pad:
        # TODO(synk): a true zero-extra-traffic path for ragged sizes needs an
        # in-kernel masked tail (manual DMA of the flat HBM array); padding to
        # the lane boundary costs one extra HBM pass on each side for the rare
        # non-128-multiple case.
        x_flat = jnp.pad(x_flat, (0, pad))
    x2d = x_flat.reshape(rows, _LANE)

    # ---- block / grid selection --------------------------------------------
    target_block = _DEFAULT_BLOCK_ROWS
    if rows > _MIN_ROWS_FOR_MULTIBLOCK:
        # Guarantee >= 2 grid blocks so the "parallel" grid axis can shard
        # across v7x's two TensorCores.
        target_block = min(target_block, _round_up(pl.cdiv(rows, 2), 16))
    if rows <= target_block:
        block_rows = rows            # single full-extent block (always legal)
    else:
        block_rows = target_block    # multiple of 16; ragged last block is OK
    grid = (pl.cdiv(rows, block_rows),)
    # Amortized 16-bit-halves hash path needs two equal sublane-aligned halves.
    split16 = (block_rows >= 16) and (block_rows % 16 == 0)

    # bf16 affine math only where the VPU has native bf16 (v6e/v7x); otherwise
    # (v5e, or any other dtype) compute in f32 and cast the result down.
    if orig_dtype == jnp.dtype(jnp.bfloat16) and not _on_v5e():
        compute_dtype = jnp.bfloat16
    else:
        compute_dtype = jnp.float32

    # Pre-fold the seed on the host (keeps it off the per-element vector path).
    seed_fold = (int(seed) * _GOLDEN) & 0x7FFFFFFF
    seed_arr = jnp.asarray([seed_fold], dtype=jnp.int32)

    itemsize = jnp.dtype(orig_dtype).itemsize
    cost = pl.CostEstimate(
        flops=int(12 * rows * _LANE),
        transcendentals=0,
        bytes_accessed=int(2 * rows * _LANE * itemsize),
    )

    out2d = pl.pallas_call(
        functools.partial(_alpha_dropout_kernel, p=float(p), split16=split16,
                          compute_dtype=compute_dtype),
        out_shape=jax.ShapeDtypeStruct((rows, _LANE), orig_dtype),
        grid=grid,
        in_specs=[
            pl.BlockSpec(memory_space=pltpu.MemorySpace.SMEM),   # folded seed
            pl.BlockSpec((block_rows, _LANE), lambda i: (i, 0)),
        ],
        out_specs=pl.BlockSpec((block_rows, _LANE), lambda i: (i, 0)),
        compiler_params=pltpu.CompilerParams(
            dimension_semantics=("parallel",),
            vmem_limit_bytes=_VMEM_LIMIT_BYTES),
        cost_estimate=cost,
    )(seed_arr, x2d)

    out_flat = out2d.reshape(-1)
    if pad:
        out_flat = out_flat[:n]
    return out_flat.reshape(orig_shape)


class AlphaDropout:
    """JAX/Pallas port of torch.nn.AlphaDropout."""

    def __init__(self, p=0.5):
        if p < 0 or p > 1:
            raise ValueError(
                "dropout probability has to be between 0 and 1, but got {}".format(p))
        self.p = p
        self.training = True

    def __call__(self, x, *, seed=0):
        return alpha_dropout(x, p=self.p, training=self.training, seed=seed)

    def __repr__(self):
        return self.__class__.__name__ + " (p = " + str(self.p) + ")"


if __name__ == "__main__":
    key = jax.random.PRNGKey(0)
    # Small NCHW input consistent with a conv-net usage of this module.
    x = jax.random.normal(key, (2, 4, 16, 16), dtype=jnp.float32)

    m = AlphaDropout(p=0.3)

    # Training mode: apply alpha dropout via the Pallas kernel.
    y_train = jax.block_until_ready(m(x, seed=1234))
    assert y_train.shape == x.shape and y_train.dtype == x.dtype

    # Sanity: every output element equals either (x*a + b) or (alpha*a + b).
    p = 0.3
    keep_prob = 1.0 - p
    a = (keep_prob + _ALPHA ** 2 * keep_prob * (1.0 - keep_prob)) ** (-0.5)
    b = -a * _ALPHA * (1.0 - keep_prob)
    kept_val = x * a + b
    drop_val = jnp.float32(_ALPHA * a + b)
    close_kept = jnp.isclose(y_train, kept_val, atol=1e-5)
    close_drop = jnp.isclose(y_train, drop_val, atol=1e-5)
    assert bool(jnp.all(close_kept | close_drop))
    # Some (but not all) elements should be dropped with p=0.3 on 2048 elems.
    n_drop = int(jnp.sum(close_drop & ~close_kept))
    assert 0 < n_drop < x.size

    # bf16 smoke test (exercises the bf16 compute path on v6e/v7x, f32 on v5e).
    y_bf = jax.block_until_ready(m(x.astype(jnp.bfloat16), seed=99))
    assert y_bf.shape == x.shape and y_bf.dtype == jnp.bfloat16
    assert bool(jnp.all(jnp.isfinite(y_bf.astype(jnp.float32))))

    # Eval mode: identity.
    m.training = False
    y_eval = jax.block_until_ready(m(x))
    assert bool(jnp.all(y_eval == x))

    print("KERNEL_OK")
</pallas_src>

<mosaic_0001>
module attributes {stable_mosaic.version = 11 : i64} {
  func.func @_alpha_dropout_kernel(%arg0: i32, %arg1: memref<1xi32, #tpu.memory_space<smem>>, %arg2: memref<16x128xf32, #tpu.memory_space<vmem>>, %arg3: memref<16x128xf32, #tpu.memory_space<vmem>>) attributes {dimension_semantics = [#tpu.dimension_semantics<parallel>], iteration_bounds = array<i64: 1>, scalar_prefetch = 0 : i64, scratch_operands = 0 : i64, tpu.core_type = #tpu.core_type<tc>, window_params = [{transform_indices = @transform_0, window_bounds = array<i64: 1>}, {transform_indices = @transform_1, window_bounds = array<i64: 16, 128>}, {transform_indices = @transform_2, window_bounds = array<i64: 16, 128>}]} {
    %c1024_i32 = arith.constant 1024 : i32
    %0 = arith.muli %arg0, %c1024_i32 : i32
    %c0 = arith.constant 0 : index
    %1 = memref.load %arg1[%c0] : memref<1xi32, #tpu.memory_space<smem>>
    %2 = arith.addi %0, %1 : i32
    %3 = tpu.iota {dimensions = array<i32: 0>} : vector<8x128xi32>
    %4 = tpu.iota {dimensions = array<i32: 1>} : vector<8x128xi32>
    %c128_i32 = arith.constant 128 : i32
    %5 = vector.broadcast %c128_i32 : i32 to vector<8x128xi32>
    %6 = arith.muli %3, %5 : vector<8x128xi32>
    %7 = arith.addi %6, %4 : vector<8x128xi32>
    %8 = vector.broadcast %2 : i32 to vector<8x128xi32>
    %9 = arith.addi %7, %8 : vector<8x128xi32>
    %c16_i32 = arith.constant 16 : i32
    %10 = vector.broadcast %c16_i32 : i32 to vector<8x128xi32>
    %11 = arith.shrui %9, %10 : vector<8x128xi32>
    %12 = arith.xori %9, %11 : vector<8x128xi32>
    %c2146121005_i32 = arith.constant 2146121005 : i32
    %13 = vector.broadcast %c2146121005_i32 : i32 to vector<8x128xi32>
    %14 = arith.muli %12, %13 : vector<8x128xi32>
    %c15_i32 = arith.constant 15 : i32
    %15 = vector.broadcast %c15_i32 : i32 to vector<8x128xi32>
    %16 = arith.shrui %14, %15 : vector<8x128xi32>
    %17 = arith.xori %14, %16 : vector<8x128xi32>
    %c-2073254261_i32 = arith.constant -2073254261 : i32
    %18 = vector.broadcast %c-2073254261_i32 : i32 to vector<8x128xi32>
    %19 = arith.muli %17, %18 : vector<8x128xi32>
    %c16_i32_0 = arith.constant 16 : i32
    %20 = vector.broadcast %c16_i32_0 : i32 to vector<8x128xi32>
    %21 = arith.shrui %19, %20 : vector<8x128xi32>
    %22 = arith.xori %19, %21 : vector<8x128xi32>
    %c65535_i32 = arith.constant 65535 : i32
    %23 = vector.broadcast %c65535_i32 : i32 to vector<8x128xi32>
    %24 = arith.andi %22, %23 : vector<8x128xi32>
    %c19661_i32 = arith.constant 19661 : i32
    %25 = vector.broadcast %c19661_i32 : i32 to vector<8x128xi32>
    %26 = arith.cmpi ult, %24, %25 : vector<8x128xi32>
    %c16_i32_1 = arith.constant 16 : i32
    %27 = vector.broadcast %c16_i32_1 : i32 to vector<8x128xi32>
    %28 = arith.shrui %22, %27 : vector<8x128xi32>
    %c19661_i32_2 = arith.constant 19661 : i32
    %29 = vector.broadcast %c19661_i32_2 : i32 to vector<8x128xi32>
    %30 = arith.cmpi ult, %28, %29 : vector<8x128xi32>
    %c0_3 = arith.constant 0 : index
    %c0_4 = arith.constant 0 : index
    %31 = vector.load %arg2[%c0_3, %c0_4] : memref<16x128xf32, #tpu.memory_space<vmem>>, vector<8x128xf32>
    %cst = arith.constant -1.75809932 : f32
    %32 = vector.broadcast %cst : f32 to vector<8x128xf32>
    %33 = arith.select %26, %32, %31 : vector<8x128xi1>, vector<8x128xf32>
    %cst_5 = arith.constant 0.860952616 : f32
    %34 = vector.broadcast %cst_5 : f32 to vector<8x128xf32>
    %35 = arith.mulf %33, %34 : vector<8x128xf32>
    %cst_6 = arith.constant 0.454092056 : f32
    %36 = vector.broadcast %cst_6 : f32 to vector<8x128xf32>
    %37 = arith.addf %35, %36 : vector<8x128xf32>
    %c0_7 = arith.constant 0 : index
    %c0_8 = arith.constant 0 : index
    %38 = vector.load %arg3[%c0_7, %c0_8] : memref<16x128xf32, #tpu.memory_space<vmem>>, vector<8x128xf32>
    tpu.vector_store %arg3[%c0_7, %c0_8], %37 {strides = array<i32>} : memref<16x128xf32, #tpu.memory_space<vmem>>, vector<8x128xf32>,
    %c8 = arith.constant 8 : index
    %c0_9 = arith.constant 0 : index
    %39 = vector.load %arg2[%c8, %c0_9] : memref<16x128xf32, #tpu.memory_space<vmem>>, vector<8x128xf32>
    %cst_10 = arith.constant -1.75809932 : f32
    %40 = vector.broadcast %cst_10 : f32 to vector<8x128xf32>
    %41 = arith.select %30, %40, %39 : vector<8x128xi1>, vector<8x128xf32>
    %cst_11 = arith.constant 0.860952616 : f32
    %42 = vector.broadcast %cst_11 : f32 to vector<8x128xf32>
    %43 = arith.mulf %41, %42 : vector<8x128xf32>
    %cst_12 = arith.constant 0.454092056 : f32
    %44 = vector.broadcast %cst_12 : f32 to vector<8x128xf32>
    %45 = arith.addf %43, %44 : vector<8x128xf32>
    %c8_13 = arith.constant 8 : index
    %c0_14 = arith.constant 0 : index
    %46 = vector.load %arg3[%c8_13, %c0_14] : memref<16x128xf32, #tpu.memory_space<vmem>>, vector<8x128xf32>
    tpu.vector_store %arg3[%c8_13, %c0_14], %45 {strides = array<i32>} : memref<16x128xf32, #tpu.memory_space<vmem>>, vector<8x128xf32>,
    return
  }
  func.func @transform_0(%arg0: i32) -> i32 {
    %c0_i32 = arith.constant 0 : i32
    %c0_i32_0 = arith.constant 0 : i32
    return %c0_i32 : i32
  }
  func.func @transform_1(%arg0: i32) -> (i32, i32) {
    %c0_i32 = arith.constant 0 : i32
    %c0_i32_0 = arith.constant 0 : i32
    return %arg0, %c0_i32 : i32, i32
  }
  func.func @transform_2(%arg0: i32) -> (i32, i32) {
    %c0_i32 = arith.constant 0 : i32
    %c0_i32_0 = arith.constant 0 : i32
    return %arg0, %c0_i32 : i32, i32
  }
}

</mosaic_0001>

<llo_original>
// kernel: tpu_custom_call.1
$region0: #{tpu_custom_call.1}
  #allocation0 [shape = 'u32[]', space=smem, size = 0x4, offset = 0x4, fixed_abs, tag = 'smem constant byte address 0x4 - core index']
  #allocation1 [shape = 'u32[144,128]{1,0:T(1,128)}', space=vmem, size = 0x12000, scoped, tag = 'internal scratch']
  #allocation2 [shape = 's32[1]{0:T(128)S(6)}', space=smem, size = 0x200, scoped, tag = 'scoped memory for tpu_custom_call.1']
  %s0 = inlined_call_operand.<no memory space> [shape: s32[1], index: 0, kind: input, shape index: {}]
  %s1 = inlined_call_operand.hbm [shape: f32[16,128], index: 1, kind: input, shape index: {}]
  %s2 = inlined_call_operand.hbm [shape: f32[16,128], index: 2, kind: output, shape index: {}]
  %s3 = sld [smem:[#allocation0]]
  $region22: #{tpu_custom_call.1} parent=0
    _
  %s5 = ssub.s32 1, %s3
  %s6 = scalar_select 0, %s5, %s3
  %7 = sst [smem:[#allocation2]] %s0
  $region1: #{tpu_custom_call.1} parent=0
    #allocation3 [shape = 'u8[8192]{0}', space=vmem, size = 0x2000, scoped, tag = 'input window, operand 1, single buffered']
    #allocation4 [shape = 's32[1]{0}', space=sflag, size = 0x4, scoped, tag = 'scoped memory for tpu_custom_call.1']
    #allocation5 [shape = 's32[1]{0}', space=sflag, size = 0x4, scoped, tag = 'scoped memory for tpu_custom_call.1']
    #allocation6 [shape = 'u8[8192]{0}', space=vmem, size = 0x2000, scoped, tag = 'output window, operand 0, single buffered']
    %8 = vsyncpa [#allocation4], 0
    %9 = vsyncpa [#allocation5], 0
    // Predicated region
    $region2: #{tpu_custom_call.1} parent=1 // pred_check
      _
    $region3: #{tpu_custom_call.1} parent=1 // pred_check_branch
      %11 = sbr.rel (0) target = $region5
    $region4: #{tpu_custom_call.1} parent=1 // pred_region
      _
    $region5: #{tpu_custom_call.1} parent=1 // pred_fallthru
      _
    // Predicated region
    $region6: #{tpu_custom_call.1} parent=1 // pred_check
      _
    $region7: #{tpu_custom_call.1} parent=1 // pred_check_branch
      %13 = sbr.rel (0) target = $region9
    $region8: #{tpu_custom_call.1} parent=1 // pred_region
      %s15 = ssub.s32 256, 256
      %16 = vsyncadd [#allocation4], %s15
      %s17 = sshll.u32 [#allocation3], 4
      %s18 = int_to_ptr.vmem [resolvable:$true] %s17
      %23 = dma.hbm_to_vmem [thread:$0]  %s1, 256, %s18, [#allocation4], 128, 128, 8
    $region9: #{tpu_custom_call.1} parent=1 // pred_fallthru
      _
    // Predicated region
    $region10: #{tpu_custom_call.1} parent=1 // pred_check
      _
    $region11: #{tpu_custom_call.1} parent=1 // pred_check_branch
      %25 = sbr.rel (0) target = $region13
    $region12: #{tpu_custom_call.1} parent=1 // pred_region
      %26 = dma.done [#allocation4], 256
    $region13: #{tpu_custom_call.1} parent=1 // pred_fallthru
      _
    %s27 = smul.u32 0, 1024
    %s28 = sld [smem:[#allocation2]]
    %s29 = sadd.s32 %s27, %s28
    %v30 = vlaneseq
    %v31 = vshrl.u32 %v30, 7
    %v32 = vlaneseq
    %v33 = vand.u32 %v32, 127
    %v34 = vmul.u32 %v31, 128
    %v35 = vadd.s32 %v34, %v33
    %v36 = vstv %s29
    %v37 = vadd.s32 %v35, %v36
    %v38 = vshrl.u32 %v37, 16
    %v39 = vxor.u32 %v37, %v38
    %v40 = vmul.u32 %v39, 2146121005
    %v41 = vshrl.u32 %v40, 15
    %v42 = vxor.u32 %v40, %v41
    %v43 = vmul.u32 %v42, 2221713035
    %v44 = vshrl.u32 %v43, 16
    %v45 = vxor.u32 %v43, %v44
    %v46 = vand.u32 %v45, 65535
    %vm47 = vcmp.lt.u32.totalorder %v46, 19661
    %v48 = vshrl.u32 %v45, 16
    %vm49 = vcmp.lt.u32.totalorder %v48, 19661
    %v50 = vld [vmem:[#allocation3] sm:$0xff]
    %v51 = vsel %vm47, -1.7580993, %v50
    %v52 = vmul.f32 %v51, 0.8609526
    %v53 = vadd.f32 %v52, 0.45409206
    %54 = vst [vmem:[#allocation6] sm:$0xff] %v53
    %v55 = vld [vmem:[#allocation3 + $0x8] sm:$0xff]
    %v56 = vsel %vm49, -1.7580993, %v55
    %v57 = vmul.f32 %v56, 0.8609526
    %v58 = vadd.f32 %v57, 0.45409206
    %59 = vst [vmem:[#allocation6 + $0x8] sm:$0xff] %v58
    // Predicated region
    $region14: #{tpu_custom_call.1} parent=1 // pred_check
      _
    $region15: #{tpu_custom_call.1} parent=1 // pred_check_branch
      %61 = sbr.rel (0) target = $region17
    $region16: #{tpu_custom_call.1} parent=1 // pred_region
      %s63 = ssub.s32 256, 256
      %64 = vsyncadd [#allocation5], %s63
      %s65 = sshll.u32 [#allocation6], 4
      %s66 = int_to_ptr.vmem [resolvable:$true] %s65
      %71 = dma.vmem_to_hbm [thread:$0]  %s66, 256, %s2, [#allocation5], 128, 128, 8
    $region17: #{tpu_custom_call.1} parent=1 // pred_fallthru
      _
    // Predicated region
    $region18: #{tpu_custom_call.1} parent=1 // pred_check
      _
    $region19: #{tpu_custom_call.1} parent=1 // pred_check_branch
      %73 = sbr.rel (0) target = $region21
    $region20: #{tpu_custom_call.1} parent=1 // pred_region
      %74 = dma.done [#allocation5], 256
    $region21: #{tpu_custom_call.1} parent=1 // pred_fallthru
      _
    %75 = vsyncpa [#allocation4], 1
    %76 = vsyncpa [#allocation5], 1

</llo_original>
